<compile_context>
chip_gen: v7x
topology: tpu7x:2x2x1
jax: 0.10.0
libtpu: 0.0.40
codegen_flags: <defaults>
</compile_context>

<pallas_src>
import math
from functools import partial

import jax
import jax.numpy as jnp
from jax.experimental import pallas as pl
from jax.experimental.pallas import tpu as pltpu

EPS = 1e-5
BITS = 8
QMAX = float(2 ** (BITS - 1))  # 128.0
# bf16 MXU operands are bit-exact only while |x_q| <= 2^(b-1) <= 256.
assert BITS <= 8, "bf16 MXU path is only exact for bits <= 8"


def _round_up(x, m):
    return ((x + m - 1) // m) * m


def _default_vmem_limit_bytes():
    # Per-generation scoped-VMEM budget: ~half of physical VMEM
    # (64 MiB on the 128 MiB parts v5e/v6e, 32 MiB on v7x's 64 MiB).
    try:
        cap = int(pltpu.get_tpu_info().vmem_capacity_bytes)
    except Exception:  # pragma: no cover - fallback if the query is unavailable
        cap = 64 * 1024 * 1024
    return int(min(max(cap // 2, 32 * 1024 * 1024), 100 * 1024 * 1024))


_VMEM_LIMIT = _default_vmem_limit_bytes()


# ----------------------------------------------------------------------------
# Kernel 1: tiled BitLinear158 matmul (weights pre-ternarized int8, scales
#           precomputed; activation scale lives in SMEM).
# ----------------------------------------------------------------------------
def _bitlinear158_mm_kernel(x_ref, w_ref, xs_ref, os_ref, b_ref, o_ref, acc_ref):
    # x_ref : (tm, tk) f32    raw activations
    # w_ref : (tk, tn) int8   ternary weight (values in {-1, 0, +1}), transposed
    # xs_ref: (1,)     f32    SMEM: activation quant scale = 2^(b-1) / gamma_x
    # os_ref: (1, tn)  f32    output scale = gamma_w * gamma_x / 2^(b-1)
    # b_ref : (1, tn)  f32    bias row
    # o_ref : (tm, tn) f32    output tile
    # acc_ref: VMEM (tm, tn) f32 accumulator (grid axis 2 = K reduction)
    k = pl.program_id(2)

    @pl.when(k == 0)
    def _():
        acc_ref[...] = jnp.zeros_like(acc_ref)

    # 8-bit absmax activation quantization with a *global* precomputed scale
    # (so tiling does not change the quantization semantics).  Values are small
    # integers -> bf16 casts are exact and the dot runs on the fast bf16 MXU
    # path on v5e/v6e/v7x.
    xq = jnp.clip(jnp.round(x_ref[...] * xs_ref[0]), -QMAX, QMAX - 1.0)
    acc_ref[...] += jnp.dot(
        xq.astype(jnp.bfloat16),
        w_ref[...].astype(jnp.bfloat16),
        preferred_element_type=jnp.float32,
    )

    @pl.when(k == pl.num_programs(2) - 1)
    def _():
        o_ref[...] = acc_ref[...] * os_ref[...] + b_ref[...]


def bitlinear158(x2d, wq_t, gw_row, bias_row, *, tm=512, tn=2048, tk=1024):
    """y = BitLinear158(x) with pre-quantized ternary (int8) weight.

    x2d     : (M, K) f32
    wq_t    : (K, N) int8, ternary weight, transposed
    gw_row  : (1, N) f32, per-output-column gamma_w (constant per projection
              group so the fused-QKV path keeps per-projection quantization)
    bias_row: (1, N) f32
    """
    M, K = x2d.shape
    N = wq_t.shape[1]

    # dim=None -> global absmax activation scale, computed once per call.
    gamma_x = jnp.maximum(jnp.max(jnp.abs(x2d)), EPS)
    x_scale = (QMAX / gamma_x).astype(jnp.float32).reshape(1)
    out_scale = (gw_row * (gamma_x / QMAX)).astype(jnp.float32)
    bias_row = bias_row.astype(jnp.float32)

    # Tile sizes: full dims when small (allowed by the (8,128) rule), otherwise
    # (8,128)/(32,128)-aligned tiles.  tn covers the full N up to 2048 so each
    # x tile is quantized exactly once; K tiles are 1024 wide.
    tm = M if M <= tm else tm
    tn = N if N <= tn else 1024
    tk = K if K <= tk else tk
    Mp, Np, Kp = _round_up(M, tm), _round_up(N, tn), _round_up(K, tk)
    if (Mp, Kp) != (M, K):
        x2d = jnp.pad(x2d, ((0, Mp - M), (0, Kp - K)))
    if (Kp, Np) != (K, N):
        wq_t = jnp.pad(wq_t, ((0, Kp - K), (0, Np - N)))
    if Np != N:
        out_scale = jnp.pad(out_scale, ((0, 0), (0, Np - N)))
        bias_row = jnp.pad(bias_row, ((0, 0), (0, Np - N)))

    out = pl.pallas_call(
        _bitlinear158_mm_kernel,
        out_shape=jax.ShapeDtypeStruct((Mp, Np), jnp.float32),
        grid_spec=pltpu.PrefetchScalarGridSpec(
            num_scalar_prefetch=0,
            grid=(Mp // tm, Np // tn, Kp // tk),
            in_specs=[
                pl.BlockSpec((tm, tk), lambda i, j, k: (i, k)),
                pl.BlockSpec((tk, tn), lambda i, j, k: (k, j)),
                pl.BlockSpec((1,), lambda i, j, k: (0,),
                             memory_space=pltpu.MemorySpace.SMEM),
                pl.BlockSpec((1, tn), lambda i, j, k: (0, j)),
                pl.BlockSpec((1, tn), lambda i, j, k: (0, j)),
            ],
            out_specs=pl.BlockSpec((tm, tn), lambda i, j, k: (i, j)),
            scratch_shapes=[pltpu.VMEM((tm, tn), jnp.float32)],
        ),
        compiler_params=pltpu.CompilerParams(
            dimension_semantics=("parallel", "parallel", "arbitrary"),
            vmem_limit_bytes=_VMEM_LIMIT,
        ),
    )(x2d, wq_t, x_scale, out_scale, bias_row)
    return out[:M, :N]


# ----------------------------------------------------------------------------
# Kernel 2: SDPA — grid (batch, query-tile, head); one (tq, D) query tile and
#           one head per step, bf16 MXU matmuls, head-averaged attention
#           weights accumulated in a resident VMEM output block.
# ----------------------------------------------------------------------------
def _sdpa_kernel(q_ref, k_ref, v_ref, o_ref, w_ref, *, inv_num_heads):
    # q_ref: (1, 1, tq, D)    k_ref/v_ref: (1, 1, S, D)
    # o_ref: (1, 1, tq, D)    w_ref: (1, tq, S)  (head-averaged weights, f32)
    h = pl.program_id(2)
    D = q_ref.shape[-1]
    scale = 1.0 / math.sqrt(D)

    # bf16 MXU path; accumulation stays f32 via preferred_element_type.
    q = (q_ref[0, 0] * scale).astype(jnp.bfloat16)          # (tq, D)
    k = k_ref[0, 0].astype(jnp.bfloat16)                     # (S, D)
    scores = jax.lax.dot_general(
        q, k, (((1,), (1,)), ((), ())), preferred_element_type=jnp.float32
    )                                                         # (tq, S) f32

    m = jnp.max(scores, axis=-1, keepdims=True)
    p = jnp.exp(scores - m)
    denom = jnp.sum(p, axis=-1, keepdims=True)
    attn = p * pl.reciprocal(denom, approx=True)              # (tq, S) f32

    v = v_ref[0, 0].astype(jnp.bfloat16)                      # (S, D)
    out = jnp.dot(attn.astype(jnp.bfloat16), v, preferred_element_type=jnp.float32)
    o_ref[0, 0] = out.astype(o_ref.dtype)

    # average_attn_weights=True fused here: the (1, tq, S) output block stays
    # resident across the innermost (head) axis and accumulates the mean.
    w_h = attn * inv_num_heads

    @pl.when(h == 0)
    def _():
        w_ref[0] = w_h

    @pl.when(h != 0)
    def _():
        w_ref[0] += w_h


def sdpa(q, k, v, *, tq=256):
    """q: (B, H, L, D), k/v: (B, H, S, D)
    -> out (B, H, L, D) f32, head-averaged attention weights (B, L, S) f32."""
    B, H, L, D = q.shape
    S = k.shape[2]

    tq = L if L <= tq else tq
    Lp = _round_up(L, tq)
    if Lp != L:
        q = jnp.pad(q, ((0, 0), (0, 0), (0, Lp - L), (0, 0)))

    out, w = pl.pallas_call(
        partial(_sdpa_kernel, inv_num_heads=1.0 / H),
        out_shape=(
            jax.ShapeDtypeStruct((B, H, Lp, D), jnp.float32),
            jax.ShapeDtypeStruct((B, Lp, S), jnp.float32),
        ),
        grid=(B, Lp // tq, H),
        in_specs=[
            pl.BlockSpec((1, 1, tq, D), lambda b, i, h: (b, h, i, 0)),
            pl.BlockSpec((1, 1, S, D), lambda b, i, h: (b, h, 0, 0)),
            pl.BlockSpec((1, 1, S, D), lambda b, i, h: (b, h, 0, 0)),
        ],
        out_specs=(
            pl.BlockSpec((1, 1, tq, D), lambda b, i, h: (b, h, i, 0)),
            pl.BlockSpec((1, tq, S), lambda b, i, h: (b, i, 0)),
        ),
        compiler_params=pltpu.CompilerParams(
            dimension_semantics=("parallel", "parallel", "arbitrary"),
            vmem_limit_bytes=_VMEM_LIMIT,
        ),
    )(q, k, v)

    if Lp != L:
        out = out[:, :, :L]
        w = w[:, :L]
    return out, w


# ----------------------------------------------------------------------------
# Module wrapper (glue only: reshapes/transposes + cached weight quantization)
# ----------------------------------------------------------------------------
def _quantize_weight_158(w):
    """Ternary (1.58-bit) weight quantization — hoisted out of the kernels."""
    gamma_w = jnp.maximum(jnp.mean(jnp.abs(w)), EPS)
    wq = jnp.clip(jnp.round(w / gamma_w), -1.0, 1.0)
    return wq.T.astype(jnp.int8), gamma_w  # (K, N) transposed, exact ternary


class BitMultiheadAttention158:
    def __init__(self, embed_dim, num_heads, key):
        assert embed_dim % num_heads == 0
        self.embed_dim = embed_dim
        self.num_heads = num_heads
        self.head_dim = embed_dim // num_heads
        E = embed_dim

        k1, k2 = jax.random.split(key, 2)
        # xavier_uniform for in_proj_weight (3E, E)
        bound_in = math.sqrt(6.0 / (3 * E + E))
        self.in_proj_weight = jax.random.uniform(
            k1, (3 * E, E), jnp.float32, -bound_in, bound_in
        )
        self.in_proj_bias = jnp.zeros((3 * E,), jnp.float32)
        # out_proj (Linear(E, E)) kaiming-uniform-like init; bias reset to 0
        bound_out = 1.0 / math.sqrt(E)
        self.out_proj_weight = jax.random.uniform(
            k2, (E, E), jnp.float32, -bound_out, bound_out
        )
        self.out_proj_bias = jnp.zeros((E,), jnp.float32)

        # ----- precompute ternary int8 weights & per-projection gamma_w -----
        wq_w, wk_w, wv_w = jnp.split(self.in_proj_weight, 3, axis=0)
        bq, bk, bv = jnp.split(self.in_proj_bias, 3, axis=0)
        self.wq_t_q, gw_q = _quantize_weight_158(wq_w)
        self.wq_t_k, gw_k = _quantize_weight_158(wk_w)
        self.wq_t_v, gw_v = _quantize_weight_158(wv_w)
        self.wq_t_o, gw_o = _quantize_weight_158(self.out_proj_weight)

        self.gw_row_q = jnp.full((1, E), gw_q, jnp.float32)
        self.gw_row_k = jnp.full((1, E), gw_k, jnp.float32)
        self.gw_row_v = jnp.full((1, E), gw_v, jnp.float32)
        self.gw_row_o = jnp.full((1, E), gw_o, jnp.float32)
        self.bias_q_row = bq.reshape(1, E)
        self.bias_k_row = bk.reshape(1, E)
        self.bias_v_row = bv.reshape(1, E)
        self.bias_o_row = self.out_proj_bias.reshape(1, E)

        # Fused QKV weights for self-attention: concatenating the already
        # per-projection-quantized weights + per-column gamma_w rows keeps the
        # exact semantics of three separate bitlinear158 calls.
        self.wq_t_qkv = jnp.concatenate(
            [self.wq_t_q, self.wq_t_k, self.wq_t_v], axis=1
        )
        self.gw_row_qkv = jnp.concatenate(
            [self.gw_row_q, self.gw_row_k, self.gw_row_v], axis=1
        )
        self.bias_qkv_row = self.in_proj_bias.reshape(1, 3 * E)

    def __call__(self, query, key, value):
        # query: (L, B, E), key/value: (S, B, E)   (batch_first=False)
        E, H, D = self.embed_dim, self.num_heads, self.head_dim
        L, B, _ = query.shape
        S = key.shape[0]

        if query is key and key is value:
            # self-attention: one activation pass / one projection kernel launch
            # TODO(synk): identity check misses equal-but-distinct arrays (falls
            # back to three kernel launches; result is identical either way).
            qkv = bitlinear158(
                query.reshape(L * B, E), self.wq_t_qkv, self.gw_row_qkv, self.bias_qkv_row
            )
            q2, k2, v2 = jnp.split(qkv, 3, axis=1)
        else:
            q2 = bitlinear158(
                query.reshape(L * B, E), self.wq_t_q, self.gw_row_q, self.bias_q_row
            )
            k2 = bitlinear158(
                key.reshape(S * B, E), self.wq_t_k, self.gw_row_k, self.bias_k_row
            )
            v2 = bitlinear158(
                value.reshape(S * B, E), self.wq_t_v, self.gw_row_v, self.bias_v_row
            )

        # (L*B, E) -> (B, H, L, D): canonical flash layout.  These transposes
        # are plain XLA ops (exactly the permutes the torch reference does);
        # keeping (L, B, H, D) would need size-1 blocks on the second-minor dim
        # inside the SDPA BlockSpecs, which violates the (8,128) block rule.
        qh = jnp.transpose(q2.reshape(L, B, H, D), (1, 2, 0, 3))
        kh = jnp.transpose(k2.reshape(S, B, H, D), (1, 2, 0, 3))
        vh = jnp.transpose(v2.reshape(S, B, H, D), (1, 2, 0, 3))

        out_bhld, attn_weights = sdpa(qh, kh, vh)

        # (B, H, L, D) -> permute(2,0,1,3).view(L*B, E) feeds the out-projection.
        out2d = jnp.transpose(out_bhld, (2, 0, 1, 3)).reshape(L * B, E)
        output = bitlinear158(
            out2d, self.wq_t_o, self.gw_row_o, self.bias_o_row
        ).reshape(L, B, E)

        return output, attn_weights  # attn_weights already head-averaged (B, L, S)


# ----------------------------------------------------------------------------
# Pure-JAX reference (for a loose numerical sanity check in __main__).
# ----------------------------------------------------------------------------
def _reference_forward(mha, query, key, value):
    def bitlin(x2d, w, b):
        gw = jnp.maximum(jnp.mean(jnp.abs(w)), EPS)
        wq = jnp.clip(jnp.round(w / gw), -1.0, 1.0)
        gx = jnp.maximum(jnp.max(jnp.abs(x2d)), EPS)
        xq = jnp.clip(jnp.round(x2d * (QMAX / gx)), -QMAX, QMAX - 1.0)
        return xq @ wq.T * (gw * gx / QMAX) + b

    E, H = mha.embed_dim, mha.num_heads
    D = E // H
    L, B, _ = query.shape
    S = key.shape[0]
    wq_w, wk_w, wv_w = jnp.split(mha.in_proj_weight, 3, axis=0)
    bq, bk, bv = jnp.split(mha.in_proj_bias, 3, axis=0)
    q = bitlin(query.reshape(L * B, E), wq_w, bq).reshape(L, B, H, D)
    k = bitlin(key.reshape(S * B, E), wk_w, bk).reshape(S, B, H, D)
    v = bitlin(value.reshape(S * B, E), wv_w, bv).reshape(S, B, H, D)
    q = jnp.transpose(q, (1, 2, 0, 3))
    k = jnp.transpose(k, (1, 2, 0, 3))
    v = jnp.transpose(v, (1, 2, 0, 3))
    scores = jnp.einsum("bhld,bhsd->bhls", q, k) / math.sqrt(D)
    attn = jax.nn.softmax(scores, axis=-1)
    out = jnp.einsum("bhls,bhsd->bhld", attn, v)
    out2d = jnp.transpose(out, (2, 0, 1, 3)).reshape(L * B, E)
    y = bitlin(out2d, mha.out_proj_weight, mha.out_proj_bias).reshape(L, B, E)
    return y, attn.mean(axis=1)


if __name__ == "__main__":
    embed_dim, num_heads = 32, 4
    L, S, B = 8, 8, 2

    root = jax.random.PRNGKey(0)
    kq, kk, kv, kparams = jax.random.split(root, 4)
    query = jax.random.normal(kq, (L, B, embed_dim), jnp.float32)
    key = jax.random.normal(kk, (S, B, embed_dim), jnp.float32)
    value = jax.random.normal(kv, (S, B, embed_dim), jnp.float32)

    mha = BitMultiheadAttention158(embed_dim, num_heads, kparams)

    # cross-attention path (three separate projections)
    output, attn_weights = mha(query, key, value)
    jax.block_until_ready(output)
    jax.block_until_ready(attn_weights)
    assert output.shape == (L, B, embed_dim)
    assert attn_weights.shape == (B, L, S)
    assert bool(jnp.all(jnp.isfinite(output)))
    assert bool(jnp.all(jnp.isfinite(attn_weights)))
    # softmax rows sum to ~1 (approx reciprocal introduces tiny error)
    assert bool(jnp.allclose(attn_weights.sum(-1), 1.0, atol=5e-2))

    # loose numerical check vs. a pure-JAX reference (bf16 MXU casts + approx
    # reciprocal make the kernels not bit-identical, so tolerances are generous)
    ref_out, ref_w = _reference_forward(mha, query, key, value)
    assert bool(jnp.allclose(output, ref_out, atol=1e-1))
    assert bool(jnp.allclose(attn_weights, ref_w, atol=3e-2))

    # self-attention path (fused QKV projection)
    output_sa, attn_sa = mha(query, query, query)
    jax.block_until_ready(output_sa)
    jax.block_until_ready(attn_sa)
    assert output_sa.shape == (L, B, embed_dim)
    assert attn_sa.shape == (B, L, L)
    assert bool(jnp.all(jnp.isfinite(output_sa)))
    ref_out_sa, ref_w_sa = _reference_forward(mha, query, query, query)
    assert bool(jnp.allclose(output_sa, ref_out_sa, atol=1e-1))
    assert bool(jnp.allclose(attn_sa, ref_w_sa, atol=3e-2))

    print("KERNEL_OK")
</pallas_src>

<mosaic_0001>
module attributes {stable_mosaic.version = 11 : i64} {
  func.func @_bitlinear158_mm_kernel(%arg0: i32, %arg1: i32, %arg2: i32, %arg3: memref<16x32xf32, #tpu.memory_space<vmem>>, %arg4: memref<32x32xi8, #tpu.memory_space<vmem>>, %arg5: memref<1xf32, #tpu.memory_space<smem>>, %arg6: memref<1x32xf32, #tpu.memory_space<vmem>>, %arg7: memref<1x32xf32, #tpu.memory_space<vmem>>, %arg8: memref<16x32xf32, #tpu.memory_space<vmem>>, %arg9: memref<16x32xf32, #tpu.memory_space<vmem>>) attributes {dimension_semantics = [#tpu.dimension_semantics<parallel>, #tpu.dimension_semantics<parallel>, #tpu.dimension_semantics<arbitrary>], iteration_bounds = array<i64: 1, 1, 1>, scalar_prefetch = 0 : i64, scratch_operands = 1 : i64, tpu.core_type = #tpu.core_type<tc>, window_params = [{transform_indices = @transform_0, window_bounds = array<i64: 16, 32>}, {transform_indices = @transform_1, window_bounds = array<i64: 32, 32>}, {transform_indices = @transform_2, window_bounds = array<i64: 1>}, {transform_indices = @transform_3, window_bounds = array<i64: 1, 32>}, {transform_indices = @transform_4, window_bounds = array<i64: 1, 32>}, {transform_indices = @transform_5, window_bounds = array<i64: 16, 32>}]} {
    %c0_i32 = arith.constant 0 : i32
    %0 = arith.cmpi eq, %arg2, %c0_i32 : i32
    %1 = arith.extui %0 : i1 to i32
    %c0_i32_0 = arith.constant 0 : i32
    %2 = arith.cmpi ne, %1, %c0_i32_0 : i32
    scf.if %2 {
      %cst_13 = arith.constant 0.000000e+00 : f32
      %22 = vector.broadcast %cst_13 : f32 to vector<16x32xf32>
      %c0_14 = arith.constant 0 : index
      %c0_15 = arith.constant 0 : index
      %23 = vector.load %arg9[%c0_14, %c0_15] : memref<16x32xf32, #tpu.memory_space<vmem>>, vector<16x32xf32>
      tpu.vector_store %arg9[%c0_14, %c0_15], %22 {strides = array<i32>} : memref<16x32xf32, #tpu.memory_space<vmem>>, vector<16x32xf32>,
    } else {
    }
    %c0 = arith.constant 0 : index
    %c0_1 = arith.constant 0 : index
    %3 = vector.load %arg3[%c0, %c0_1] : memref<16x32xf32, #tpu.memory_space<vmem>>, vector<16x32xf32>
    %c0_2 = arith.constant 0 : index
    %4 = memref.load %arg5[%c0_2] : memref<1xf32, #tpu.memory_space<smem>>
    %5 = vector.broadcast %4 : f32 to vector<16x32xf32>
    %6 = arith.mulf %3, %5 : vector<16x32xf32>
    %7 = math.roundeven %6 : vector<16x32xf32>
    %cst = arith.constant -1.280000e+02 : f32
    %cst_3 = arith.constant 1.270000e+02 : f32
    %8 = vector.broadcast %cst : f32 to vector<16x32xf32>
    %9 = arith.maximumf %8, %7 : vector<16x32xf32>
    %10 = vector.broadcast %cst_3 : f32 to vector<16x32xf32>
    %11 = arith.minimumf %10, %9 : vector<16x32xf32>
    %c0_4 = arith.constant 0 : index
    %c0_5 = arith.constant 0 : index
    %12 = vector.load %arg9[%c0_4, %c0_5] : memref<16x32xf32, #tpu.memory_space<vmem>>, vector<16x32xf32>
    %13 = arith.truncf %11 : vector<16x32xf32> to vector<16x32xbf16>
    %c0_6 = arith.constant 0 : index
    %c0_7 = arith.constant 0 : index
    %14 = vector.load %arg4[%c0_6, %c0_7] : memref<32x32xi8, #tpu.memory_space<vmem>>, vector<32x32xi8>
    %15 = arith.sitofp %14 : vector<32x32xi8> to vector<32x32xbf16>
    %cst_8 = arith.constant dense<0.000000e+00> : vector<16x32xf32>
    %16 = tpu.matmul %13, %15, %cst_8 {dimension_numbers = #tpu.dot_dimension_numbers<[1], [0], [0], [1], [0, 0, 1, 1], [], []>} : vector<16x32xbf16>, vector<32x32xbf16>, vector<16x32xf32> -> vector<16x32xf32>
    %17 = arith.addf %12, %16 : vector<16x32xf32>
    %c0_9 = arith.constant 0 : index
    %c0_10 = arith.constant 0 : index
    %18 = vector.load %arg9[%c0_9, %c0_10] : memref<16x32xf32, #tpu.memory_space<vmem>>, vector<16x32xf32>
    tpu.vector_store %arg9[%c0_9, %c0_10], %17 {strides = array<i32>} : memref<16x32xf32, #tpu.memory_space<vmem>>, vector<16x32xf32>,
    %c0_i32_11 = arith.constant 0 : i32
    %19 = arith.cmpi eq, %arg2, %c0_i32_11 : i32
    %20 = arith.extui %19 : i1 to i32
    %c0_i32_12 = arith.constant 0 : i32
    %21 = arith.cmpi ne, %20, %c0_i32_12 : i32
    scf.if %21 {
      %c0_13 = arith.constant 0 : index
      %c0_14 = arith.constant 0 : index
      %22 = vector.load %arg9[%c0_13, %c0_14] : memref<16x32xf32, #tpu.memory_space<vmem>>, vector<16x32xf32>
      %c0_15 = arith.constant 0 : index
      %c0_16 = arith.constant 0 : index
      %23 = vector.load %arg6[%c0_15, %c0_16] : memref<1x32xf32, #tpu.memory_space<vmem>>, vector<1x32xf32>
      %24 = vector.broadcast %23 : vector<1x32xf32> to vector<16x32xf32>
      %25 = arith.mulf %22, %24 : vector<16x32xf32>
      %c0_17 = arith.constant 0 : index
      %c0_18 = arith.constant 0 : index
      %26 = vector.load %arg7[%c0_17, %c0_18] : memref<1x32xf32, #tpu.memory_space<vmem>>, vector<1x32xf32>
      %27 = vector.broadcast %26 : vector<1x32xf32> to vector<16x32xf32>
      %28 = arith.addf %25, %27 : vector<16x32xf32>
      %c0_19 = arith.constant 0 : index
      %c0_20 = arith.constant 0 : index
      %29 = vector.load %arg8[%c0_19, %c0_20] : memref<16x32xf32, #tpu.memory_space<vmem>>, vector<16x32xf32>
      tpu.vector_store %arg8[%c0_19, %c0_20], %28 {strides = array<i32>} : memref<16x32xf32, #tpu.memory_space<vmem>>, vector<16x32xf32>,
    } else {
    }
    return
  }
  func.func @transform_0(%arg0: i32, %arg1: i32, %arg2: i32) -> (i32, i32) {
    %c0_i32 = arith.constant 0 : i32
    return %arg0, %arg2 : i32, i32
  }
  func.func @transform_1(%arg0: i32, %arg1: i32, %arg2: i32) -> (i32, i32) {
    %c0_i32 = arith.constant 0 : i32
    return %arg2, %arg1 : i32, i32
  }
  func.func @transform_2(%arg0: i32, %arg1: i32, %arg2: i32) -> i32 {
    %c0_i32 = arith.constant 0 : i32
    %c0_i32_0 = arith.constant 0 : i32
    return %c0_i32 : i32
  }
  func.func @transform_3(%arg0: i32, %arg1: i32, %arg2: i32) -> (i32, i32) {
    %c0_i32 = arith.constant 0 : i32
    %c0_i32_0 = arith.constant 0 : i32
    return %c0_i32, %arg1 : i32, i32
  }
  func.func @transform_4(%arg0: i32, %arg1: i32, %arg2: i32) -> (i32, i32) {
    %c0_i32 = arith.constant 0 : i32
    %c0_i32_0 = arith.constant 0 : i32
    return %c0_i32, %arg1 : i32, i32
  }
  func.func @transform_5(%arg0: i32, %arg1: i32, %arg2: i32) -> (i32, i32) {
    %c0_i32 = arith.constant 0 : i32
    return %arg0, %arg1 : i32, i32
  }
}

</mosaic_0001>

<llo_original>
// kernel: tpu_custom_call.1
$region0: #{tpu_custom_call.1}
  #allocation0 [shape = 'u32[]', space=smem, size = 0x4, offset = 0x4, fixed_abs, tag = 'smem constant byte address 0x4 - core index']
  #allocation1 [shape = 'u32[144,128]{1,0:T(1,128)}', space=vmem, size = 0x12000, scoped, tag = 'internal scratch']
  #allocation2 [shape = 'f32[16,32]{1,0:T(8,128)}', space=vmem, size = 0x2000, scoped, tag = 'scratch operand']
  #allocation3 [shape = 'f32[1]{0:T(128)S(6)}', space=smem, size = 0x200, scoped, tag = 'scoped memory for tpu_custom_call.1']
  %s0 = inlined_call_operand.hbm [shape: f32[16,32], index: 0, kind: input, shape index: {}]
  %s1 = inlined_call_operand.hbm [shape: s8[32,32], index: 1, kind: input, shape index: {}]
  %s2 = inlined_call_operand.<no memory space> [shape: f32[1], index: 2, kind: input, shape index: {}]
  %s3 = inlined_call_operand.vmem [shape: f32[1,32], index: 3, kind: input, shape index: {}]
  %s4 = inlined_call_operand.vmem [shape: f32[1,32], index: 4, kind: input, shape index: {}]
  %s5 = inlined_call_operand.hbm [shape: f32[16,32], index: 5, kind: output, shape index: {}]
  %s6 = sld [smem:[#allocation0]]
  $region46: #{tpu_custom_call.1} parent=0
    _
  %s8 = ssub.s32 1, %s6
  %s9 = scalar_select 0, %s8, %s6
  %10 = sst [smem:[#allocation3]] %s2
  $region1: #{tpu_custom_call.1} parent=0
    #allocation4 [shape = 'u8[8192]{0}', space=vmem, size = 0x2000, scoped, tag = 'input window, operand 0, single buffered']
    #allocation5 [shape = 's32[1]{0}', space=sflag, size = 0x4, scoped, tag = 'scoped memory for tpu_custom_call.1']
    #allocation6 [shape = 's32[1]{0}', space=sflag, size = 0x4, scoped, tag = 'scoped memory for tpu_custom_call.1']
    #allocation7 [shape = 'u8[4096]{0}', space=vmem, size = 0x1000, scoped, tag = 'input window, operand 1, single buffered']
    #allocation8 [shape = 's32[1]{0}', space=sflag, size = 0x4, scoped, tag = 'scoped memory for tpu_custom_call.1']
    #allocation9 [shape = 'u8[8192]{0}', space=vmem, size = 0x2000, scoped, tag = 'output window, operand 0, single buffered']
    %11 = vsyncpa [#allocation5], 0
    %12 = vsyncpa [#allocation8], 0
    %13 = vsyncpa [#allocation6], 0
    // Predicated region
    $region2: #{tpu_custom_call.1} parent=1 // pred_check
      _
    $region3: #{tpu_custom_call.1} parent=1 // pred_check_branch
      %15 = sbr.rel (0) target = $region5
    $region4: #{tpu_custom_call.1} parent=1 // pred_region
      %s17 = ssub.s32 256, 256
      %18 = vsyncadd [#allocation5], %s17
      %s19 = sshll.u32 [#allocation4], 4
      %s20 = int_to_ptr.vmem [resolvable:$true] %s19
      %25 = dma.hbm_to_vmem [thread:$0]  %s0, 256, %s20, [#allocation5], 128, 128, 8
    $region5: #{tpu_custom_call.1} parent=1 // pred_fallthru
      _
    // Predicated region
    $region6: #{tpu_custom_call.1} parent=1 // pred_check
      _
    $region7: #{tpu_custom_call.1} parent=1 // pred_check_branch
      %27 = sbr.rel (0) target = $region9
    $region8: #{tpu_custom_call.1} parent=1 // pred_region
      %s29 = ssub.s32 128, 128
      %30 = vsyncadd [#allocation8], %s29
      %s32 = sshll.u32 [#allocation7], 4
      %s33 = int_to_ptr.vmem [resolvable:$true] %s32
      %35 = dma.hbm_to_vmem [thread:$0]  %s1, 128, %s33, [#allocation8]
    $region9: #{tpu_custom_call.1} parent=1 // pred_fallthru
      _
    // Predicated region
    $region10: #{tpu_custom_call.1} parent=1 // pred_check
      _
    $region11: #{tpu_custom_call.1} parent=1 // pred_check_branch
      %37 = sbr.rel (0) target = $region13
    $region12: #{tpu_custom_call.1} parent=1 // pred_region
      _
    $region13: #{tpu_custom_call.1} parent=1 // pred_fallthru
      _
    // Predicated region
    $region14: #{tpu_custom_call.1} parent=1 // pred_check
      _
    $region15: #{tpu_custom_call.1} parent=1 // pred_check_branch
      %39 = sbr.rel (0) target = $region17
    $region16: #{tpu_custom_call.1} parent=1 // pred_region
      _
    $region17: #{tpu_custom_call.1} parent=1 // pred_fallthru
      _
    // Predicated region
    $region18: #{tpu_custom_call.1} parent=1 // pred_check
      _
    $region19: #{tpu_custom_call.1} parent=1 // pred_check_branch
      %41 = sbr.rel (0) target = $region21
    $region20: #{tpu_custom_call.1} parent=1 // pred_region
      _
    $region21: #{tpu_custom_call.1} parent=1 // pred_fallthru
      _
    // Predicated region
    $region22: #{tpu_custom_call.1} parent=1 // pred_check
      _
    $region23: #{tpu_custom_call.1} parent=1 // pred_check_branch
      %43 = sbr.rel (0) target = $region25
    $region24: #{tpu_custom_call.1} parent=1 // pred_region
      %44 = dma.done [#allocation5], 256
    $region25: #{tpu_custom_call.1} parent=1 // pred_fallthru
      _
    // Predicated region
    $region26: #{tpu_custom_call.1} parent=1 // pred_check
      _
    $region27: #{tpu_custom_call.1} parent=1 // pred_check_branch
      %46 = sbr.rel (0) target = $region29
    $region28: #{tpu_custom_call.1} parent=1 // pred_region
      %47 = dma.done [#allocation8], 128
    $region29: #{tpu_custom_call.1} parent=1 // pred_fallthru
      _
    %p49 = scmp.eq.s32.totalorder 0, 0
    // Predicated region
    $region30: #{tpu_custom_call.1} parent=1 // pred_check
      %p50 = pneg %p49
    $region31: #{tpu_custom_call.1} parent=1 // pred_check_branch
      %52 = sbr.rel (%p50) target = $region33
    $region32: #{tpu_custom_call.1} parent=1 // pred_region
      %vm53 = vcmask 261120
      %54 = vst.msk [vmem:[#allocation2] sm:$0xff] %vm53, 0.0
      %55 = vst.msk [vmem:[#allocation2 + $0x8] sm:$0xff] %vm53, 0.0
    $region33: #{tpu_custom_call.1} parent=1 // pred_fallthru
      _
    %v56 = vld [vmem:[#allocation4] sm:$0xff]
    %v57 = vld [vmem:[#allocation4 + $0x8] sm:$0xff]
    %s58 = sld [smem:[#allocation3]]
    %v59 = vstv %s58
    %v60 = vmul.f32 %v56, %v59
    %v61 = vmul.f32 %v57, %v59
    %v62 = vround.ne.pseudo %v60
    %v63 = vround.ne.pseudo %v61
    %v64 = vmax.f32 %v62, -128.0
    %v65 = vmax.f32 %v63, -128.0
    %v66 = vmin.f32 %v64, 127.0
    %v67 = vmin.f32 %v65, 127.0
    %v68 = vld [vmem:[#allocation2] sm:$0xff]
    %v69 = vld [vmem:[#allocation2 + $0x8] sm:$0xff]
    %v70 = vpack.c.bf16 %v67, %v66
    %v71 = vld [vmem:[#allocation7] sm:$0xff]
    %v72 = vunpack.c.l.s8.bf16 %v71
    %v73 = vunpack.c.h.s8.bf16 %v71
    %vm74 = vcmask 261120
    %v76 = vsel %vm74, %v70, 0
    %78 = vmatprep.subr.bf16.mxu0 0
    %79 = vmatpush1.bf16.msra.mxu0 %v72
    %80 = vmatprep.subr.bf16.mxu0 0
    %81 = vmatpush1.bf16.msra.mxu0 %v73
    %82 = vmatprep.subr.bf16.mxu0 0
    %83 = vmatpush1.bf16.msra.mxu0 0
    %84 = vmatprep.subr.bf16.mxu0 0
    %85 = vmatpush1.bf16.msra.mxu0 0
    %86 = vmatprep.subr.bf16.mxu0 0
    %87 = vmatpush1.bf16.msra.mxu0 0
    %88 = vmatprep.subr.bf16.mxu0 0
    %89 = vmatpush1.bf16.msra.mxu0 0
    %90 = vmatprep.subr.bf16.mxu0 0
    %91 = vmatpush1.bf16.msra.mxu0 0
    %92 = vmatprep.subr.bf16.mxu0 0
    %93 = vmatpush1.bf16.msra.mxu0 0
    %94 = vmatprep.subr.bf16.mxu0 0
    %95 = vmatpush1.bf16.msra.mxu0 0
    %96 = vmatprep.subr.bf16.mxu0 0
    %97 = vmatpush1.bf16.msra.mxu0 0
    %98 = vmatprep.subr.bf16.mxu0 0
    %99 = vmatpush1.bf16.msra.mxu0 0
    %100 = vmatprep.subr.bf16.mxu0 0
    %101 = vmatpush1.bf16.msra.mxu0 0
    %102 = vmatprep.subr.bf16.mxu0 0
    %103 = vmatpush1.bf16.msra.mxu0 0
    %104 = vmatprep.subr.bf16.mxu0 0
    %105 = vmatpush1.bf16.msra.mxu0 0
    %106 = vmatprep.subr.bf16.mxu0 0
    %107 = vmatpush1.bf16.msra.mxu0 0
    %108 = vmatprep.subr.bf16.mxu0 0
    %109 = vmatpush1.bf16.msra.mxu0 0
    %110 = vmatprep.mubr.bf16.mxu0 0
    %111 = vmatmul.mubr.bf16.gmra.mrb[0].mxu0 %v76
    %v112 = vpop.f32.mrb[0].mxu0
    %v113 = vadd.f32 0.0, %v112
    %v114 = vpop.f32.mrb[0].mxu0
    %v115 = vpop.f32.mrb[0].mxu0
    %v116 = vadd.f32 0.0, %v115
    %v117 = vpop.f32.mrb[0].mxu0
    %118 = vdwg.mxu0
    %v119 = vadd.f32 %v68, %v113
    %v120 = vadd.f32 %v69, %v116
    %121 = vst.msk [vmem:[#allocation2] sm:$0xff] %vm74, %v119
    %122 = vst.msk [vmem:[#allocation2 + $0x8] sm:$0xff] %vm74, %v120
    // Predicated region
    $region34: #{tpu_custom_call.1} parent=1 // pred_check
      %p123 = pneg %p49
    $region35: #{tpu_custom_call.1} parent=1 // pred_check_branch
      %125 = sbr.rel (%p123) target = $region37
    $region36: #{tpu_custom_call.1} parent=1 // pred_region
      %v126 = vld [vmem:[#allocation2] sm:$0xff]
      %v127 = vld [vmem:[#allocation2 + $0x8] sm:$0xff]
      %v128 = vld [vmem:[%s3] sm:$0x1]
      %v130 = vlaneseq
      %v131 = vshrl.u32 %v130, 7
      %v132 = vsub.s32 0, %v131
      %v133 = vrot.slane %v128, %v132
      %v135 = vmul.f32 %v126, %v133
      %v136 = vmul.f32 %v127, %v133
      %v137 = vld [vmem:[%s4] sm:$0x1]
      %v139 = vlaneseq
      %v140 = vshrl.u32 %v139, 7
      %v141 = vsub.s32 0, %v140
      %v142 = vrot.slane %v137, %v141
      %v144 = vadd.f32 %v135, %v142
      %v145 = vadd.f32 %v136, %v142
      %146 = vst.msk [vmem:[#allocation9] sm:$0xff] %vm74, %v144
      %147 = vst.msk [vmem:[#allocation9 + $0x8] sm:$0xff] %vm74, %v145
    $region37: #{tpu_custom_call.1} parent=1 // pred_fallthru
      _
    // Predicated region
    $region38: #{tpu_custom_call.1} parent=1 // pred_check
      _
    $region39: #{tpu_custom_call.1} parent=1 // pred_check_branch
      %149 = sbr.rel (0) target = $region41
    $region40: #{tpu_custom_call.1} parent=1 // pred_region
      %s151 = ssub.s32 256, 256
      %152 = vsyncadd [#allocation6], %s151
      %s153 = sshll.u32 [#allocation9], 4
      %s154 = int_to_ptr.vmem [resolvable:$true] %s153
      %159 = dma.vmem_to_hbm [thread:$0]  %s154, 256, %s5, [#allocation6], 128, 128, 8
    $region41: #{tpu_custom_call.1} parent=1 // pred_fallthru
      _
    // Predicated region
    $region42: #{tpu_custom_call.1} parent=1 // pred_check
      _
    $region43: #{tpu_custom_call.1} parent=1 // pred_check_branch
      %161 = sbr.rel (0) target = $region45
    $region44: #{tpu_custom_call.1} parent=1 // pred_region
      %162 = dma.done [#allocation6], 256
    $region45: #{tpu_custom_call.1} parent=1 // pred_fallthru
      _
    %163 = vsyncpa [#allocation5], 1
    %164 = vsyncpa [#allocation8], 1
    %165 = vsyncpa [#allocation6], 1

</llo_original>
